<compile_context>
chip_gen: v5e
topology: v5e:2x2
jax: 0.10.0
libtpu: 0.0.40
codegen_flags: <defaults>
</compile_context>

<pallas_src>
import functools

import jax
import jax.numpy as jnp
from jax import lax
from jax.experimental import pallas as pl
from jax.experimental.pallas import tpu as pltpu

_LANES = 128
_MAX_TM = 4096   # rows per block: f32 -> 2 inputs x 2 bufs x 2 MiB = 8 MiB VMEM
_CHUNK = 64      # rows per inner reduction step (8 f32 vregs per operand)


def _round_up(x, m):
    return ((x + m - 1) // m) * m


def _accumulate(p_ref, m_ref, oi_ref, os_ref, ot_ref, *, tm, chunk, valid_rows):
    """Add this block's partial sums of sigmoid(p), m and sigmoid(p)*m.

    valid_rows: None  -> whole block valid (no mask code emitted);
                scalar -> number of valid leading rows in this block
                          (may be <= 0 for fully-empty trailing blocks).
    """
    nch = tm // chunk
    g = chunk // 8
    bf16_in = p_ref.dtype == jnp.bfloat16

    def body(i, carry):
        ai, asum, atgt = carry
        r0 = pl.multiple_of(i * chunk, chunk)
        x = p_ref[pl.ds(r0, chunk), :]
        t = m_ref[pl.ds(r0, chunk), :].astype(jnp.float32)
        # Single-transcendental sigmoid; bf16 stays packed through the EUP.
        xc = x if bf16_in else x.astype(jnp.float32)
        s = (jnp.tanh(xc * 0.5) * 0.5 + 0.5).astype(jnp.float32)
        if valid_rows is not None:
            rid = i * chunk + lax.broadcasted_iota(jnp.int32, (chunk, _LANES), 0)
            ok = rid < valid_rows
            s = jnp.where(ok, s, 0.0)
            t = jnp.where(ok, t, 0.0)
        # Layout-preserving reshape; axis-0 sums are plain cross-vreg VPU adds.
        ai = ai + jnp.sum((s * t).reshape(g, 8, _LANES), axis=0)
        asum = asum + jnp.sum(s.reshape(g, 8, _LANES), axis=0)
        atgt = atgt + jnp.sum(t.reshape(g, 8, _LANES), axis=0)
        return ai, asum, atgt

    zero = jnp.zeros((8, _LANES), jnp.float32)
    ai, asum, atgt = lax.fori_loop(0, nch, body, (zero, zero, zero),
                                   unroll=2 if nch >= 2 else 1)
    # Touch the resident output accumulators once per grid step.
    oi_ref[...] += ai
    os_ref[...] += asum
    ot_ref[...] += atgt


def _dice_kernel(p_ref, m_ref, oi_ref, os_ref, ot_ref, *,
                 tm, chunk, spc, rows_valid, need_mask):
    c = pl.program_id(0)   # "parallel" core-split axis
    k = pl.program_id(1)   # "arbitrary" reduction axis

    @pl.when(k == 0)
    def _():
        oi_ref[...] = jnp.zeros_like(oi_ref)
        os_ref[...] = jnp.zeros_like(os_ref)
        ot_ref[...] = jnp.zeros_like(ot_ref)

    if not need_mask:
        _accumulate(p_ref, m_ref, oi_ref, os_ref, ot_ref,
                    tm=tm, chunk=chunk, valid_rows=None)
    else:
        row_start = (c * spc + k) * tm   # first (unclamped) row of this block

        @pl.when(row_start + tm <= rows_valid)   # fully-valid block
        def _():
            _accumulate(p_ref, m_ref, oi_ref, os_ref, ot_ref,
                        tm=tm, chunk=chunk, valid_rows=None)

        @pl.when(row_start + tm > rows_valid)    # partial / empty edge block
        def _():
            _accumulate(p_ref, m_ref, oi_ref, os_ref, ot_ref,
                        tm=tm, chunk=chunk, valid_rows=rows_valid - row_start)


def dice_loss(pred, mask, smooth=1.0):
    """Pallas implementation of DiceLoss.forward (returns `dice`, a scalar)."""
    pf = pred.reshape(-1)
    mf = mask.reshape(-1)
    assert pf.size == mf.size, "reference semantics require equal flattened sizes"
    n = pf.size
    smooth = float(smooth)

    R = n // _LANES               # full 128-lane rows handled by the kernel
    rem = n - R * _LANES          # ragged tail (< 128 elements)

    # Sublane multiple required by the narrower dtype (f32:8, bf16:16, i8/bool:32).
    sub = max(8, 32 // pf.dtype.itemsize, 32 // mf.dtype.itemsize)

    # Tiny inputs: not worth a kernel launch.
    if R < sub:
        inputs = jax.nn.sigmoid(pf.astype(jnp.float32))
        targets = mf.astype(jnp.float32)
        inter = jnp.sum(inputs * targets)
        return (2.0 * inter + smooth) / (jnp.sum(inputs) + jnp.sum(targets) + smooth)

    head = R * _LANES
    if rem:
        # TODO(synk): XLA may still materialize the head prefix slices; a fully
        # copy-free ragged path would need a 1-D BlockSpec / manual-DMA kernel.
        p_head = pf[:head]
        m_head = mf[:head]
        pt = pf[head:].astype(jnp.float32)
        mt = mf[head:].astype(jnp.float32)
        st = jax.nn.sigmoid(pt)
        tail_i = jnp.sum(st * mt)
        tail_s = jnp.sum(st)
        tail_t = jnp.sum(mt)
    else:
        p_head, m_head = pf, mf                       # free reshape, no copy
        tail_i = tail_s = tail_t = jnp.float32(0.0)

    p2 = p_head.reshape(R, _LANES)
    m2 = m_head.reshape(R, _LANES)

    # Rows per block: roughly half the rows per core, capped, sublane-aligned,
    # and a multiple of the inner chunk once it is at least one chunk.
    tm = _round_up(min(pl.cdiv(R, 2), _MAX_TM), sub)
    if tm >= _CHUNK:
        tm = min(_round_up(tm, _CHUNK), _MAX_TM)
    chunk = min(_CHUNK, tm)

    nblocks = pl.cdiv(R, tm)
    spc = pl.cdiv(nblocks, 2)                 # grid steps per core
    need_mask = (2 * spc * tm) != R           # any partial / empty edge block?
    last_block = nblocks - 1

    def in_index(c, k):
        # Clamp the (at most one) past-the-end block; it is zeroed by the mask.
        return (jnp.minimum(c * spc + k, last_block), 0)

    kernel = functools.partial(
        _dice_kernel, tm=tm, chunk=chunk, spc=spc,
        rows_valid=R, need_mask=need_mask)

    acc_shape = jax.ShapeDtypeStruct((2 * 8, _LANES), jnp.float32)
    acc_spec = pl.BlockSpec((8, _LANES), lambda c, k: (c, 0))

    cost = pl.CostEstimate(
        flops=8 * n,
        transcendentals=n,
        bytes_accessed=head * (p2.dtype.itemsize + m2.dtype.itemsize)
        + 3 * 2 * 8 * _LANES * 4,
    )

    o_i, o_s, o_t = pl.pallas_call(
        kernel,
        out_shape=(acc_shape, acc_shape, acc_shape),
        grid_spec=pltpu.PrefetchScalarGridSpec(
            num_scalar_prefetch=0,
            grid=(2, spc),
            in_specs=[
                pl.BlockSpec((tm, _LANES), in_index),
                pl.BlockSpec((tm, _LANES), in_index),
            ],
            out_specs=(acc_spec, acc_spec, acc_spec),
        ),
        compiler_params=pltpu.CompilerParams(
            dimension_semantics=("parallel", "arbitrary")),
        cost_estimate=cost,
    )(p2, m2)

    inter = jnp.sum(o_i) + tail_i
    denom = jnp.sum(o_s) + jnp.sum(o_t) + tail_s + tail_t
    return (2.0 * inter + smooth) / (denom + smooth)


def _dice_ref(pred, mask, smooth=1.0):
    inputs = jax.nn.sigmoid(pred.astype(jnp.float32)).reshape(-1)
    targets = mask.astype(jnp.float32).reshape(-1)
    inter = jnp.sum(inputs * targets)
    return (2.0 * inter + smooth) / (jnp.sum(inputs) + jnp.sum(targets) + smooth)


if __name__ == "__main__":
    key = jax.random.PRNGKey(0)
    kp, km = jax.random.split(key)

    B, C, H, W = 2, 4, 16, 16
    pred = jax.random.normal(kp, (B, C, H, W), dtype=jnp.float32)
    mask = (jax.random.uniform(km, (B, C, H, W)) > 0.5).astype(jnp.float32)

    loss = dice_loss(pred, mask, smooth=1.0)
    loss = jax.block_until_ready(loss)

    ref = _dice_ref(pred, mask, smooth=1.0)
    assert jnp.allclose(loss, ref, rtol=1e-5, atol=1e-5), (loss, ref)

    print("KERNEL_OK")
</pallas_src>

<mosaic_0001>
module attributes {stable_mosaic.version = 11 : i64} {
  func.func @_dice_kernel(%arg0: i32, %arg1: i32, %arg2: memref<8x128xf32, #tpu.memory_space<vmem>>, %arg3: memref<8x128xf32, #tpu.memory_space<vmem>>, %arg4: memref<8x128xf32, #tpu.memory_space<vmem>>, %arg5: memref<8x128xf32, #tpu.memory_space<vmem>>, %arg6: memref<8x128xf32, #tpu.memory_space<vmem>>) attributes {dimension_semantics = [#tpu.dimension_semantics<parallel>, #tpu.dimension_semantics<arbitrary>], iteration_bounds = array<i64: 2, 1>, scalar_prefetch = 0 : i64, scratch_operands = 0 : i64, tpu.core_type = #tpu.core_type<tc>, window_params = [{transform_indices = @transform_0, window_bounds = array<i64: 8, 128>}, {transform_indices = @transform_1, window_bounds = array<i64: 8, 128>}, {transform_indices = @transform_2, window_bounds = array<i64: 8, 128>}, {transform_indices = @transform_3, window_bounds = array<i64: 8, 128>}, {transform_indices = @transform_4, window_bounds = array<i64: 8, 128>}]} {
    %c0_i32 = arith.constant 0 : i32
    %0 = arith.cmpi eq, %arg1, %c0_i32 : i32
    %1 = arith.extui %0 : i1 to i32
    %c0_i32_0 = arith.constant 0 : i32
    %2 = arith.cmpi ne, %1, %c0_i32_0 : i32
    scf.if %2 {
      %cst_21 = arith.constant 0.000000e+00 : f32
      %36 = vector.broadcast %cst_21 : f32 to vector<8x128xf32>
      %c0_22 = arith.constant 0 : index
      %c0_23 = arith.constant 0 : index
      %37 = vector.load %arg4[%c0_22, %c0_23] : memref<8x128xf32, #tpu.memory_space<vmem>>, vector<8x128xf32>
      tpu.vector_store %arg4[%c0_22, %c0_23], %36 {strides = array<i32>} : memref<8x128xf32, #tpu.memory_space<vmem>>, vector<8x128xf32>,
      %cst_24 = arith.constant 0.000000e+00 : f32
      %38 = vector.broadcast %cst_24 : f32 to vector<8x128xf32>
      %c0_25 = arith.constant 0 : index
      %c0_26 = arith.constant 0 : index
      %39 = vector.load %arg5[%c0_25, %c0_26] : memref<8x128xf32, #tpu.memory_space<vmem>>, vector<8x128xf32>
      tpu.vector_store %arg5[%c0_25, %c0_26], %38 {strides = array<i32>} : memref<8x128xf32, #tpu.memory_space<vmem>>, vector<8x128xf32>,
      %cst_27 = arith.constant 0.000000e+00 : f32
      %40 = vector.broadcast %cst_27 : f32 to vector<8x128xf32>
      %c0_28 = arith.constant 0 : index
      %c0_29 = arith.constant 0 : index
      %41 = vector.load %arg6[%c0_28, %c0_29] : memref<8x128xf32, #tpu.memory_space<vmem>>, vector<8x128xf32>
      tpu.vector_store %arg6[%c0_28, %c0_29], %40 {strides = array<i32>} : memref<8x128xf32, #tpu.memory_space<vmem>>, vector<8x128xf32>,
    } else {
    }
    %cst = arith.constant 0.000000e+00 : f32
    %3 = vector.broadcast %cst : f32 to vector<8x128xf32>
    %c0_i32_1 = arith.constant 0 : i32
    %c8_i32 = arith.constant 8 : i32
    %4 = arith.muli %c0_i32_1, %c8_i32 : i32
    %5 = tpu.assume_multiple %4, 8 : i32
    %6 = arith.index_cast %5 : i32 to index
    %c0 = arith.constant 0 : index
    %7 = vector.load %arg2[%6, %c0] : memref<8x128xf32, #tpu.memory_space<vmem>>, vector<8x128xf32>
    %8 = arith.index_cast %5 : i32 to index
    %c0_2 = arith.constant 0 : index
    %9 = vector.load %arg3[%8, %c0_2] : memref<8x128xf32, #tpu.memory_space<vmem>>, vector<8x128xf32>
    %cst_3 = arith.constant 5.000000e-01 : f32
    %10 = vector.broadcast %cst_3 : f32 to vector<8x128xf32>
    %11 = arith.mulf %7, %10 : vector<8x128xf32>
    %12 = math.tanh %11 : vector<8x128xf32>
    %cst_4 = arith.constant 5.000000e-01 : f32
    %13 = vector.broadcast %cst_4 : f32 to vector<8x128xf32>
    %14 = arith.mulf %12, %13 : vector<8x128xf32>
    %cst_5 = arith.constant 5.000000e-01 : f32
    %15 = vector.broadcast %cst_5 : f32 to vector<8x128xf32>
    %16 = arith.addf %14, %15 : vector<8x128xf32>
    %17 = arith.mulf %16, %9 : vector<8x128xf32>
    %18 = vector.shape_cast %17 : vector<8x128xf32> to vector<1x8x128xf32>
    %cst_6 = arith.constant dense<0.000000e+00> : vector<8x128xf32>
    %19 = vector.multi_reduction <add>, %18, %cst_6 [0] : vector<1x8x128xf32> to vector<8x128xf32>
    %20 = arith.addf %3, %19 : vector<8x128xf32>
    %21 = vector.shape_cast %16 : vector<8x128xf32> to vector<1x8x128xf32>
    %cst_7 = arith.constant dense<0.000000e+00> : vector<8x128xf32>
    %22 = vector.multi_reduction <add>, %21, %cst_7 [0] : vector<1x8x128xf32> to vector<8x128xf32>
    %23 = arith.addf %3, %22 : vector<8x128xf32>
    %24 = vector.shape_cast %9 : vector<8x128xf32> to vector<1x8x128xf32>
    %cst_8 = arith.constant dense<0.000000e+00> : vector<8x128xf32>
    %25 = vector.multi_reduction <add>, %24, %cst_8 [0] : vector<1x8x128xf32> to vector<8x128xf32>
    %26 = arith.addf %3, %25 : vector<8x128xf32>
    %c1_i32 = arith.constant 1 : i32
    %c0_9 = arith.constant 0 : index
    %c0_10 = arith.constant 0 : index
    %27 = vector.load %arg4[%c0_9, %c0_10] : memref<8x128xf32, #tpu.memory_space<vmem>>, vector<8x128xf32>
    %28 = arith.addf %27, %20 : vector<8x128xf32>
    %c0_11 = arith.constant 0 : index
    %c0_12 = arith.constant 0 : index
    %29 = vector.load %arg4[%c0_11, %c0_12] : memref<8x128xf32, #tpu.memory_space<vmem>>, vector<8x128xf32>
    tpu.vector_store %arg4[%c0_11, %c0_12], %28 {strides = array<i32>} : memref<8x128xf32, #tpu.memory_space<vmem>>, vector<8x128xf32>,
    %c0_13 = arith.constant 0 : index
    %c0_14 = arith.constant 0 : index
    %30 = vector.load %arg5[%c0_13, %c0_14] : memref<8x128xf32, #tpu.memory_space<vmem>>, vector<8x128xf32>
    %31 = arith.addf %30, %23 : vector<8x128xf32>
    %c0_15 = arith.constant 0 : index
    %c0_16 = arith.constant 0 : index
    %32 = vector.load %arg5[%c0_15, %c0_16] : memref<8x128xf32, #tpu.memory_space<vmem>>, vector<8x128xf32>
    tpu.vector_store %arg5[%c0_15, %c0_16], %31 {strides = array<i32>} : memref<8x128xf32, #tpu.memory_space<vmem>>, vector<8x128xf32>,
    %c0_17 = arith.constant 0 : index
    %c0_18 = arith.constant 0 : index
    %33 = vector.load %arg6[%c0_17, %c0_18] : memref<8x128xf32, #tpu.memory_space<vmem>>, vector<8x128xf32>
    %34 = arith.addf %33, %26 : vector<8x128xf32>
    %c0_19 = arith.constant 0 : index
    %c0_20 = arith.constant 0 : index
    %35 = vector.load %arg6[%c0_19, %c0_20] : memref<8x128xf32, #tpu.memory_space<vmem>>, vector<8x128xf32>
    tpu.vector_store %arg6[%c0_19, %c0_20], %34 {strides = array<i32>} : memref<8x128xf32, #tpu.memory_space<vmem>>, vector<8x128xf32>,
    return
  }
  func.func @transform_0(%arg0: i32, %arg1: i32) -> (i32, i32) {
    %c1_i32 = arith.constant 1 : i32
    %0 = arith.muli %arg0, %c1_i32 : i32
    %1 = arith.addi %0, %arg1 : i32
    %c1_i32_0 = arith.constant 1 : i32
    %2 = arith.minsi %1, %c1_i32_0 : i32
    %c0_i32 = arith.constant 0 : i32
    %c0_i32_1 = arith.constant 0 : i32
    return %2, %c0_i32 : i32, i32
  }
  func.func @transform_1(%arg0: i32, %arg1: i32) -> (i32, i32) {
    %c1_i32 = arith.constant 1 : i32
    %0 = arith.muli %arg0, %c1_i32 : i32
    %1 = arith.addi %0, %arg1 : i32
    %c1_i32_0 = arith.constant 1 : i32
    %2 = arith.minsi %1, %c1_i32_0 : i32
    %c0_i32 = arith.constant 0 : i32
    %c0_i32_1 = arith.constant 0 : i32
    return %2, %c0_i32 : i32, i32
  }
  func.func @transform_2(%arg0: i32, %arg1: i32) -> (i32, i32) {
    %c0_i32 = arith.constant 0 : i32
    %c0_i32_0 = arith.constant 0 : i32
    return %arg0, %c0_i32 : i32, i32
  }
  func.func @transform_3(%arg0: i32, %arg1: i32) -> (i32, i32) {
    %c0_i32 = arith.constant 0 : i32
    %c0_i32_0 = arith.constant 0 : i32
    return %arg0, %c0_i32 : i32, i32
  }
  func.func @transform_4(%arg0: i32, %arg1: i32) -> (i32, i32) {
    %c0_i32 = arith.constant 0 : i32
    %c0_i32_0 = arith.constant 0 : i32
    return %arg0, %c0_i32 : i32, i32
  }
}

</mosaic_0001>

<llo_original>
// kernel: tpu_custom_call.1
$region0: #{tpu_custom_call.1}
  #allocation0 [shape = 'u32[]', space=smem, size = 0x4, offset = 0x4, fixed_abs, tag = 'smem constant byte address 0x4 - core index']
  #allocation1 [shape = 'u32[72,128]{1,0:T(1,128)}', space=vmem, size = 0x9000, scoped, tag = 'internal scratch']
  %s0 = inlined_call_operand.hbm [shape: f32[16,128], index: 0, kind: input, shape index: {}]
  %s1 = inlined_call_operand.hbm [shape: f32[16,128], index: 1, kind: input, shape index: {}]
  %s2 = inlined_call_operand.hbm [shape: f32[16,128], index: 2, kind: output, shape index: {0}]
  %s3 = inlined_call_operand.hbm [shape: f32[16,128], index: 3, kind: output, shape index: {1}]
  %s4 = inlined_call_operand.hbm [shape: f32[16,128], index: 4, kind: output, shape index: {2}]
  %5 = xla_tuple %s2, %s3, %s4
  %s6 = sld [smem:[#allocation0]]
  $region69: #{tpu_custom_call.1} parent=0
    _
  %s8 = ssub.s32 1, %s6
  %s9 = scalar_select 0, %s8, %s6
  $region1: #{tpu_custom_call.1} parent=0
    #allocation2 [shape = 'u8[8192]{0}', space=vmem, size = 0x2000, scoped, tag = 'input window, operand 0']
    #allocation3 [shape = 's32[2]{0}', space=sflag, size = 0x8, scoped, tag = 'scoped memory for tpu_custom_call.1']
    #allocation4 [shape = 's32[2]{0}', space=sflag, size = 0x8, scoped, tag = 'scoped memory for tpu_custom_call.1']
    #allocation5 [shape = 'u8[8192]{0}', space=vmem, size = 0x2000, scoped, tag = 'input window, operand 1']
    #allocation6 [shape = 's32[2]{0}', space=sflag, size = 0x8, scoped, tag = 'scoped memory for tpu_custom_call.1']
    #allocation7 [shape = 'u8[8192]{0}', space=vmem, size = 0x2000, scoped, tag = 'output window, operand 0']
    #allocation8 [shape = 'u8[8192]{0}', space=vmem, size = 0x2000, scoped, tag = 'output window, operand 1']
    #allocation9 [shape = 's32[2]{0}', space=sflag, size = 0x8, scoped, tag = 'scoped memory for tpu_custom_call.1']
    #allocation10 [shape = 'u8[8192]{0}', space=vmem, size = 0x2000, scoped, tag = 'output window, operand 2']
    %10 = vsyncpa [#allocation3], 0
    %s11 = scalar_lea.sflag [#allocation3], 1
    %12 = vsyncpa %s11, 0
    %13 = vsyncpa [#allocation6], 0
    %s14 = scalar_lea.sflag [#allocation6], 1
    %15 = vsyncpa %s14, 0
    %16 = vsyncpa [#allocation4], 0
    %s17 = scalar_lea.sflag [#allocation4], 1
    %18 = vsyncpa %s17, 0
    %19 = vsyncpa [#allocation9], 0
    %s20 = scalar_lea.sflag [#allocation9], 1
    %21 = vsyncpa %s20, 0
    loop: start=0, step=1, limit=4
    $region2: #{tpu_custom_call.1} parent=1 // loop_pre_header
      _
    $region3: #{tpu_custom_call.1} parent=1 // loop_header
      %s23 = sphi 0, %s27
      %p24 = scmp.ge.s32.totalorder %s23, 4
      %s30 = sphi 0, %s42
      %s31 = sphi 0, %s38
      %s32 = sphi 0, %s30
      %s33 = sphi 0, %s31
      %s34 = sphi 0, %s32
      %s35 = sphi 0, %s33
      %s51 = sphi 0, %s53
      %s54 = sphi 0, %s51
      %s55 = sphi 0, %s54
      %s71 = sphi 0, %s55
      %s83 = sphi 0, %s85
      %s86 = sphi 0, %s83
      %s87 = sphi 0, %s86
      %s103 = sphi 0, %s87
      %s109 = sphi 0, %s111
      %s112 = sphi 0, %s109
      %s113 = sphi 0, %s112
      %s129 = sphi 0, %s113
      %s135 = sphi 0, %s137
      %s138 = sphi 0, %s135
      %s139 = sphi 0, %s138
      %s155 = sphi 0, %s139
      %s161 = sphi 0, %s163
      %s164 = sphi 0, %s161
      %s165 = sphi 0, %s164
      %s181 = sphi 0, %s165
    $region4: #{tpu_custom_call.1} parent=1 // loop_header_branch
      %26 = sbr.rel (%p24) target = $region8
    $region5: #{tpu_custom_call.1} parent=1 // loop_body
      %s28 = ssub.s32 %s23, 1
      %s29 = ssub.s32 %s23, 2
      %s36 = sadd.s32 1, %s31
      %p37 = scmp.ge.s32.totalorder %s36, 1
      %s38 = scalar_select %p37, 0, %s36
      %s39 = sadd.s32 1, %s30
      %s40 = scalar_select %p37, %s39, %s30
      %p41 = scmp.ge.s32.totalorder %s40, 2
      %s42 = scalar_select %p41, 0, %s40
      %s43 = sadd.s32 %s30, %s31
      %p44 = scmp.lt.s32.totalorder %s43, 1
      %s45 = scalar_select %p44, %s43, 1
      %s46 = sadd.s32 %s42, %s38
      %p47 = scmp.lt.s32.totalorder %s46, 1
      %s48 = scalar_select %p47, %s46, 1
      %s49 = ssub.s32 %s45, %s48
      %p50 = scmp.eq.s32.totalorder %s49, 0
      %s52 = sadd.s32 %s51, 1
      %s53 = scalar_select %p50, %s51, %s52
      %p56 = pneg %p50
      %p57 = scmp.eq.s32.totalorder %s23, 1
      %p58 = por %p56, %p57
      %p59 = scmp.ne.s32.totalorder %s51, %s54
      %p60 = scmp.eq.s32.totalorder %s23, 0
      %p61 = por %p59, %p60
      %p62 = scmp.ne.s32.totalorder %s51, %s54
      %p63 = scmp.eq.s32.totalorder %s28, 1
      %p64 = por %p62, %p63
      %p65 = scmp.ne.s32.totalorder %s54, %s55
      %p66 = scmp.eq.s32.totalorder %s28, 0
      %p67 = por %p65, %p66
      %p68 = scmp.ne.s32.totalorder %s54, %s55
      %p69 = scmp.eq.s32.totalorder %s29, 1
      %p70 = por %p68, %p69
      %p72 = scmp.ne.s32.totalorder %s55, %s71
      %p73 = scmp.eq.s32.totalorder %s29, 0
      %p74 = por %p72, %p73
      %s75 = sadd.s32 %s30, %s31
      %p76 = scmp.lt.s32.totalorder %s75, 1
      %s77 = scalar_select %p76, %s75, 1
      %s78 = sadd.s32 %s42, %s38
      %p79 = scmp.lt.s32.totalorder %s78, 1
      %s80 = scalar_select %p79, %s78, 1
      %s81 = ssub.s32 %s77, %s80
      %p82 = scmp.eq.s32.totalorder %s81, 0
      %s84 = sadd.s32 %s83, 1
      %s85 = scalar_select %p82, %s83, %s84
      %p88 = pneg %p82
      %p89 = scmp.eq.s32.totalorder %s23, 1
      %p90 = por %p88, %p89
      %p91 = scmp.ne.s32.totalorder %s83, %s86
      %p92 = scmp.eq.s32.totalorder %s23, 0
      %p93 = por %p91, %p92
      %p94 = scmp.ne.s32.totalorder %s83, %s86
      %p95 = scmp.eq.s32.totalorder %s28, 1
      %p96 = por %p94, %p95
      %p97 = scmp.ne.s32.totalorder %s86, %s87
      %p98 = scmp.eq.s32.totalorder %s28, 0
      %p99 = por %p97, %p98
      %p100 = scmp.ne.s32.totalorder %s86, %s87
      %p101 = scmp.eq.s32.totalorder %s29, 1
      %p102 = por %p100, %p101
      %p104 = scmp.ne.s32.totalorder %s87, %s103
      %p105 = scmp.eq.s32.totalorder %s29, 0
      %p106 = por %p104, %p105
      %s107 = ssub.s32 %s30, %s42
      %p108 = scmp.eq.s32.totalorder %s107, 0
      %s110 = sadd.s32 %s109, 1
      %s111 = scalar_select %p108, %s109, %s110
      %p114 = pneg %p108
      %p115 = scmp.eq.s32.totalorder %s23, 1
      %p116 = por %p114, %p115
      %p117 = scmp.ne.s32.totalorder %s109, %s112
      %p118 = scmp.eq.s32.totalorder %s23, 0
      %p119 = por %p117, %p118
      %p120 = scmp.ne.s32.totalorder %s109, %s112
      %p121 = scmp.eq.s32.totalorder %s28, 1
      %p122 = por %p120, %p121
      %p123 = scmp.ne.s32.totalorder %s112, %s113
      %p124 = scmp.eq.s32.totalorder %s28, 0
      %p125 = por %p123, %p124
      %p126 = scmp.ne.s32.totalorder %s112, %s113
      %p127 = scmp.eq.s32.totalorder %s29, 1
      %p128 = por %p126, %p127
      %p130 = scmp.ne.s32.totalorder %s113, %s129
      %p131 = scmp.eq.s32.totalorder %s29, 0
      %p132 = por %p130, %p131
      %s133 = ssub.s32 %s30, %s42
      %p134 = scmp.eq.s32.totalorder %s133, 0
      %s136 = sadd.s32 %s135, 1
      %s137 = scalar_select %p134, %s135, %s136
      %p140 = pneg %p134
      %p141 = scmp.eq.s32.totalorder %s23, 1
      %p142 = por %p140, %p141
      %p143 = scmp.ne.s32.totalorder %s135, %s138
      %p144 = scmp.eq.s32.totalorder %s23, 0
      %p145 = por %p143, %p144
      %p146 = scmp.ne.s32.totalorder %s135, %s138
      %p147 = scmp.eq.s32.totalorder %s28, 1
      %p148 = por %p146, %p147
      %p149 = scmp.ne.s32.totalorder %s138, %s139
      %p150 = scmp.eq.s32.totalorder %s28, 0
      %p151 = por %p149, %p150
      %p152 = scmp.ne.s32.totalorder %s138, %s139
      %p153 = scmp.eq.s32.totalorder %s29, 1
      %p154 = por %p152, %p153
      %p156 = scmp.ne.s32.totalorder %s139, %s155
      %p157 = scmp.eq.s32.totalorder %s29, 0
      %p158 = por %p156, %p157
      %s159 = ssub.s32 %s30, %s42
      %p160 = scmp.eq.s32.totalorder %s159, 0
      %s162 = sadd.s32 %s161, 1
      %s163 = scalar_select %p160, %s161, %s162
      %p166 = pneg %p160
      %p167 = scmp.eq.s32.totalorder %s23, 1
      %p168 = por %p166, %p167
      %p169 = scmp.ne.s32.totalorder %s161, %s164
      %p170 = scmp.eq.s32.totalorder %s23, 0
      %p171 = por %p169, %p170
      %p172 = scmp.ne.s32.totalorder %s161, %s164
      %p173 = scmp.eq.s32.totalorder %s28, 1
      %p174 = por %p172, %p173
      %p175 = scmp.ne.s32.totalorder %s164, %s165
      %p176 = scmp.eq.s32.totalorder %s28, 0
      %p177 = por %p175, %p176
      %p178 = scmp.ne.s32.totalorder %s164, %s165
      %p179 = scmp.eq.s32.totalorder %s29, 1
      %p180 = por %p178, %p179
      %p182 = scmp.ne.s32.totalorder %s165, %s181
      %p183 = scmp.eq.s32.totalorder %s29, 0
      %p184 = por %p182, %p183
      %p185 = scmp.le.s32.totalorder 1, %s23
      %p186 = scmp.lt.s32.totalorder %s23, 3
      %p187 = pnand %p185, %p186
      %p188 = pneg %p187
      // Predicated region
      $region9: #{tpu_custom_call.1} parent=5 // pred_check
        _
      $region10: #{tpu_custom_call.1} parent=5 // pred_check_branch
        %190 = sbr.rel (%p187) target = $region12
      $region11: #{tpu_custom_call.1} parent=5 // pred_region
        %s191 = ssub.s32 %s23, 1
      $region12: #{tpu_custom_call.1} parent=5 // pred_fallthru
        _
      %p192 = scmp.lt.s32.totalorder %s23, 2
      // Predicated region
      $region13: #{tpu_custom_call.1} parent=5 // pred_check
        %p193 = pneg %p192
      $region14: #{tpu_custom_call.1} parent=5 // pred_check_branch
        %195 = sbr.rel (%p193) target = $region16
      $region15: #{tpu_custom_call.1} parent=5 // pred_region
        // Predicated region
        $region17: #{tpu_custom_call.1} parent=15 // pred_check
          %p196 = pneg %p61
        $region18: #{tpu_custom_call.1} parent=15 // pred_check_branch
          %198 = sbr.rel (%p196) target = $region20
        $region19: #{tpu_custom_call.1} parent=15 // pred_region
          %s199 = sand.u32 %s51, 1
          %s200 = scalar_lea.sflag [#allocation3], %s199
          %s201 = sand.u32 %s51, 1
          %s202 = smul.addr %s201, 8
          %s203 = scalar_lea.vmem [#allocation2], %s202
          %s204 = sadd.s32 %s30, %s31
          %p205 = scmp.lt.s32.totalorder %s204, 1
          %s206 = scalar_select %p205, %s204, 1
          %208 = vsyncadd %s200, 0
          %s209 = smul.addr %s206, 8
          %s210 = scalar_lea.hbm %s0, %s209
          %s212 = sshll.u32 %s210, 4
          %s213 = int_to_ptr.hbm [resolvable:$true] %s212
          %s214 = sshll.u32 %s203, 4
          %s215 = int_to_ptr.vmem [resolvable:$true] %s214
          %217 = dma.hbm_to_vmem [thread:$0]  %s213, 128, %s215, %s200
        $region20: #{tpu_custom_call.1} parent=15 // pred_fallthru
          _
        // Predicated region
        $region21: #{tpu_custom_call.1} parent=15 // pred_check
          %p218 = pneg %p93
        $region22: #{tpu_custom_call.1} parent=15 // pred_check_branch
          %220 = sbr.rel (%p218) target = $region24
        $region23: #{tpu_custom_call.1} parent=15 // pred_region
          %s221 = sand.u32 %s83, 1
          %s222 = scalar_lea.sflag [#allocation6], %s221
          %s223 = sand.u32 %s83, 1
          %s224 = smul.addr %s223, 8
          %s225 = scalar_lea.vmem [#allocation5], %s224
          %s226 = sadd.s32 %s30, %s31
          %p227 = scmp.lt.s32.totalorder %s226, 1
          %s228 = scalar_select %p227, %s226, 1
          %230 = vsyncadd %s222, 0
          %s231 = smul.addr %s228, 8
          %s232 = scalar_lea.hbm %s1, %s231
          %s234 = sshll.u32 %s232, 4
          %s235 = int_to_ptr.hbm [resolvable:$true] %s234
          %s236 = sshll.u32 %s225, 4
          %s237 = int_to_ptr.vmem [resolvable:$true] %s236
          %239 = dma.hbm_to_vmem [thread:$0]  %s235, 128, %s237, %s222
        $region24: #{tpu_custom_call.1} parent=15 // pred_fallthru
          _
      $region16: #{tpu_custom_call.1} parent=5 // pred_fallthru
        _
      %p240 = scmp.le.s32.totalorder 1, %s23
      %p241 = scmp.lt.s32.totalorder %s23, 3
      %p242 = pnand %p240, %p241
      %p243 = pneg %p242
      // Predicated region
      $region25: #{tpu_custom_call.1} parent=5 // pred_check
        _
      $region26: #{tpu_custom_call.1} parent=5 // pred_check_branch
        %245 = sbr.rel (%p242) target = $region28
      $region27: #{tpu_custom_call.1} parent=5 // pred_region
        %s246 = ssub.s32 %s23, 1
        %s247 = sand.u32 %s54, 1
        %s248 = scalar_lea.sflag [#allocation3], %s247
        %s249 = sand.u32 %s54, 1
        %s250 = smul.addr %s249, 8
        %s251 = scalar_lea.vmem [#allocation2], %s250
        // Predicated region
        $region29: #{tpu_custom_call.1} parent=27 // pred_check
          %p252 = pneg %p67
        $region30: #{tpu_custom_call.1} parent=27 // pred_check_branch
          %254 = sbr.rel (%p252) target = $region32
        $region31: #{tpu_custom_call.1} parent=27 // pred_region
          %256 = dma.done %s248, 128
        $region32: #{tpu_custom_call.1} parent=27 // pred_fallthru
          _
        %s257 = sand.u32 %s86, 1
        %s258 = scalar_lea.sflag [#allocation6], %s257
        %s259 = sand.u32 %s86, 1
        %s260 = smul.addr %s259, 8
        %s261 = scalar_lea.vmem [#allocation5], %s260
        // Predicated region
        $region33: #{tpu_custom_call.1} parent=27 // pred_check
          %p262 = pneg %p99
        $region34: #{tpu_custom_call.1} parent=27 // pred_check_branch
          %264 = sbr.rel (%p262) target = $region36
        $region35: #{tpu_custom_call.1} parent=27 // pred_region
          %266 = dma.done %s258, 128
        $region36: #{tpu_custom_call.1} parent=27 // pred_fallthru
          _
        %s267 = sand.u32 %s54, 1
        %s268 = scalar_lea.sflag [#allocation3], %s267
        %s269 = sand.u32 %s54, 1
        %s270 = smul.addr %s269, 8
        %s271 = scalar_lea.vmem [#allocation2], %s270
        %p272 = pneg %p67
        %p273 = pneg %p64
        %s274 = sand.u32 %s86, 1
        %s275 = scalar_lea.sflag [#allocation6], %s274
        %s276 = sand.u32 %s86, 1
        %s277 = smul.addr %s276, 8
        %s278 = scalar_lea.vmem [#allocation5], %s277
        %p279 = pneg %p99
        %p280 = pneg %p96
        %p281 = pneg %p125
        %p282 = pneg %p122
        %s283 = sand.u32 %s112, 1
        %s284 = scalar_lea.sflag [#allocation4], %s283
        %s285 = sand.u32 %s112, 1
        %s286 = smul.addr %s285, 8
        %s287 = scalar_lea.vmem [#allocation7], %s286
        %p288 = pneg %p151
        %p289 = pneg %p148
        %s290 = sand.u32 %s28, 1
        %s291 = scalar_lea.sflag [#allocation9], %s290
        %s292 = sand.u32 %s138, 1
        %s293 = smul.addr %s292, 8
        %s294 = scalar_lea.vmem [#allocation8], %s293
        %p295 = pneg %p177
        %p296 = pneg %p174
        %s297 = sand.u32 %s28, 1
        %s298 = scalar_lea.sflag [#allocation9], %s297
        %s299 = sand.u32 %s164, 1
        %s300 = smul.addr %s299, 8
        %s301 = scalar_lea.vmem [#allocation10], %s300
        %s302 = sadd.s32 %s32, %s33
        %p303 = scmp.lt.s32.totalorder %s302, 1
        %s304 = scalar_select %p303, %s302, 1
        %s305 = sadd.s32 %s32, %s33
        %p306 = scmp.lt.s32.totalorder %s305, 1
        %s307 = scalar_select %p306, %s305, 1
        %p308 = scmp.eq.s32.totalorder %s33, 0
        // Predicated region
        $region37: #{tpu_custom_call.1} parent=27 // pred_check
          %p309 = pneg %p308
        $region38: #{tpu_custom_call.1} parent=27 // pred_check_branch
          %311 = sbr.rel (%p309) target = $region40
        $region39: #{tpu_custom_call.1} parent=27 // pred_region
          %312 = vst [vmem:[%s287] sm:$0xff] 0.0
          %313 = vst [vmem:[%s294] sm:$0xff] 0.0
          %314 = vst [vmem:[%s301] sm:$0xff] 0.0
        $region40: #{tpu_custom_call.1} parent=27 // pred_fallthru
          _
        %v315 = vld [vmem:[%s251] sm:$0xff]
        %v316 = vld [vmem:[%s261] sm:$0xff]
        %v317 = vmul.f32 %v315, 0.5
        %v318 = vtanh.pop %v317
        %v319 = vmul.f32 %v318, 0.5
        %v320 = vadd.f32 %v319, 0.5
        %v321 = vmul.f32 %v320, %v316
        %v322 = vadd.f32 %v321, 0.0
        %v323 = vadd.f32 %v322, 0.0
        %v324 = vadd.f32 %v320, 0.0
        %v325 = vadd.f32 %v324, 0.0
        %v326 = vadd.f32 %v316, 0.0
        %v327 = vadd.f32 %v326, 0.0
        %v328 = vld [vmem:[%s287] sm:$0xff]
        %v329 = vadd.f32 %v328, %v323
        %330 = vst [vmem:[%s287] sm:$0xff] %v329
        %v331 = vld [vmem:[%s294] sm:$0xff]
        %v332 = vadd.f32 %v331, %v325
        %333 = vst [vmem:[%s294] sm:$0xff] %v332
        %v334 = vld [vmem:[%s301] sm:$0xff]
        %v335 = vadd.f32 %v334, %v327
        %336 = vst [vmem:[%s301] sm:$0xff] %v335
        %s337 = sand.u32 %s112, 1
        %s338 = scalar_lea.sflag [#allocation4], %s337
        %s339 = sand.u32 %s112, 1
        %s340 = smul.addr %s339, 8
        %s341 = scalar_lea.vmem [#allocation7], %s340
        %s342 = sand.u32 %s28, 1
        %s343 = scalar_lea.sflag [#allocation9], %s342
        %s344 = sand.u32 %s138, 1
        %s345 = smul.addr %s344, 8
        %s346 = scalar_lea.vmem [#allocation8], %s345
        %s347 = sand.u32 %s28, 1
        %s348 = scalar_lea.sflag [#allocation9], %s347
        %s349 = sand.u32 %s164, 1
        %s350 = smul.addr %s349, 8
        %s351 = scalar_lea.vmem [#allocation10], %s350
        // Predicated region
        $region41: #{tpu_custom_call.1} parent=27 // pred_check
          %p352 = pneg %p122
        $region42: #{tpu_custom_call.1} parent=27 // pred_check_branch
          %354 = sbr.rel (%p352) target = $region44
        $region43: #{tpu_custom_call.1} parent=27 // pred_region
          %356 = vsyncadd %s338, 0
          %s357 = smul.addr %s32, 8
          %s358 = scalar_lea.hbm %s2, %s357
          %s360 = sshll.u32 %s341, 4
          %s361 = int_to_ptr.vmem [resolvable:$true] %s360
          %s362 = sshll.u32 %s358, 4
          %s363 = int_to_ptr.hbm [resolvable:$true] %s362
          %365 = dma.vmem_to_hbm [thread:$0]  %s361, 128, %s363, %s338
        $region44: #{tpu_custom_call.1} parent=27 // pred_fallthru
          _
        // Predicated region
        $region45: #{tpu_custom_call.1} parent=27 // pred_check
          %p366 = pneg %p148
        $region46: #{tpu_custom_call.1} parent=27 // pred_check_branch
          %368 = sbr.rel (%p366) target = $region48
        $region47: #{tpu_custom_call.1} parent=27 // pred_region
          %370 = vsyncadd %s343, 0
          %s371 = smul.addr %s32, 8
          %s372 = scalar_lea.hbm %s3, %s371
          %s374 = sshll.u32 %s346, 4
          %s375 = int_to_ptr.vmem [resolvable:$true] %s374
          %s376 = sshll.u32 %s372, 4
          %s377 = int_to_ptr.hbm [resolvable:$true] %s376
          %379 = dma.vmem_to_hbm [thread:$0]  %s375, 128, %s377, %s343
        $region48: #{tpu_custom_call.1} parent=27 // pred_fallthru
          _
        // Predicated region
        $region49: #{tpu_custom_call.1} parent=27 // pred_check
          %p380 = pneg %p174
        $region50: #{tpu_custom_call.1} parent=27 // pred_check_branch
          %382 = sbr.rel (%p380) target = $region52
        $region51: #{tpu_custom_call.1} parent=27 // pred_region
          %384 = vsyncadd %s348, 0
          %s385 = smul.addr %s32, 8
          %s386 = scalar_lea.hbm %s4, %s385
          %s388 = sshll.u32 %s351, 4
          %s389 = int_to_ptr.vmem [resolvable:$true] %s388
          %s390 = sshll.u32 %s386, 4
          %s391 = int_to_ptr.hbm [resolvable:$true] %s390
          %393 = dma.vmem_to_hbm [thread:$0]  %s389, 128, %s391, %s348
        $region52: #{tpu_custom_call.1} parent=27 // pred_fallthru
          _
      $region28: #{tpu_custom_call.1} parent=5 // pred_fallthru
        _
      %p394 = scmp.le.s32.totalorder 2, %s23
      // Predicated region
      $region53: #{tpu_custom_call.1} parent=5 // pred_check
        %p395 = pneg %p394
      $region54: #{tpu_custom_call.1} parent=5 // pred_check_branch
        %397 = sbr.rel (%p395) target = $region56
      $region55: #{tpu_custom_call.1} parent=5 // pred_region
        %s398 = ssub.s32 %s23, 2
        // Predicated region
        $region57: #{tpu_custom_call.1} parent=55 // pred_check
          %p399 = pneg %p128
        $region58: #{tpu_custom_call.1} parent=55 // pred_check_branch
          %401 = sbr.rel (%p399) target = $region60
        $region59: #{tpu_custom_call.1} parent=55 // pred_region
          %s402 = sand.u32 %s113, 1
          %s403 = scalar_lea.sflag [#allocation4], %s402
          %s404 = sand.u32 %s113, 1
          %s405 = smul.addr %s404, 8
          %s406 = scalar_lea.vmem [#allocation7], %s405
          %408 = dma.done %s403, 128
        $region60: #{tpu_custom_call.1} parent=55 // pred_fallthru
          _
        // Predicated region
        $region61: #{tpu_custom_call.1} parent=55 // pred_check
          %p409 = pneg %p154
        $region62: #{tpu_custom_call.1} parent=55 // pred_check_branch
          %411 = sbr.rel (%p409) target = $region64
        $region63: #{tpu_custom_call.1} parent=55 // pred_region
          %s412 = sand.u32 %s29, 1
          %s413 = scalar_lea.sflag [#allocation9], %s412
          %s414 = sand.u32 %s139, 1
          %s415 = smul.addr %s414, 8
          %s416 = scalar_lea.vmem [#allocation8], %s415
          %418 = dma.done %s413, 128
        $region64: #{tpu_custom_call.1} parent=55 // pred_fallthru
          _
        // Predicated region
        $region65: #{tpu_custom_call.1} parent=55 // pred_check
          %p419 = pneg %p180
        $region66: #{tpu_custom_call.1} parent=55 // pred_check_branch
          %421 = sbr.rel (%p419) target = $region68
        $region67: #{tpu_custom_call.1} parent=55 // pred_region
          %s422 = sand.u32 %s29, 1
          %s423 = scalar_lea.sflag [#allocation9], %s422
          %s424 = sand.u32 %s165, 1
          %s425 = smul.addr %s424, 8
          %s426 = scalar_lea.vmem [#allocation10], %s425
          %428 = dma.done %s423, 128
        $region68: #{tpu_custom_call.1} parent=55 // pred_fallthru
          _
      $region56: #{tpu_custom_call.1} parent=5 // pred_fallthru
        _
    $region6: #{tpu_custom_call.1} parent=1 // loop_footer
      %s27 = sadd.s32 1, %s23
    $region7: #{tpu_custom_call.1} parent=1 // loop_footer_branch
      %22 = sbr.rel target = $region3
    $region8: #{tpu_custom_call.1} parent=1 // loop_exit
      _
    %429 = vsyncpa [#allocation3], 1
    %s430 = scalar_lea.sflag [#allocation3], 1
    %431 = vsyncpa %s430, 1
    %432 = vsyncpa [#allocation6], 1
    %s433 = scalar_lea.sflag [#allocation6], 1
    %434 = vsyncpa %s433, 1
    %435 = vsyncpa [#allocation4], 1
    %s436 = scalar_lea.sflag [#allocation4], 1
    %437 = vsyncpa %s436, 1
    %438 = vsyncpa [#allocation9], 1
    %s439 = scalar_lea.sflag [#allocation9], 1
    %440 = vsyncpa %s439, 1

</llo_original>
